<compile_context>
chip_gen: v6e
topology: v6e:2x2x1
jax: 0.10.0
libtpu: 0.0.40
codegen_flags: <defaults>
</compile_context>

<pallas_src>
import numpy as np
import jax
import jax.numpy as jnp
from jax.experimental import pallas as pl
from jax.experimental.pallas import tpu as pltpu

_LANE = 128
_VMEM_LIMIT = 32 * 1024 * 1024      # safe on v5e/v6e/v7x
_MLP_TM_MAX = 512


def _round_up(n, m):
    return ((n + m - 1) // m) * m


# ----------------------------------------------------------------------------
# Deterministic graph construction (numpy, mirrors GraphBase.__init__ buffers)
# ----------------------------------------------------------------------------
def _icosahedron():
    phi = (1.0 + np.sqrt(5.0)) / 2.0
    verts = np.array(
        [[-1, phi, 0], [1, phi, 0], [-1, -phi, 0], [1, -phi, 0],
         [0, -1, phi], [0, 1, phi], [0, -1, -phi], [0, 1, -phi],
         [phi, 0, -1], [phi, 0, 1], [-phi, 0, -1], [-phi, 0, 1]],
        dtype=np.float64)
    verts /= np.linalg.norm(verts, axis=1, keepdims=True)
    faces = np.array(
        [[0, 11, 5], [0, 5, 1], [0, 1, 7], [0, 7, 10], [0, 10, 11],
         [1, 5, 9], [5, 11, 4], [11, 10, 2], [10, 7, 6], [7, 1, 8],
         [3, 9, 4], [3, 4, 2], [3, 2, 6], [3, 6, 8], [3, 8, 9],
         [4, 9, 5], [2, 4, 11], [6, 2, 10], [8, 6, 7], [9, 8, 1]],
        dtype=np.int64)
    return verts, faces


def _subdivide(verts, faces):
    verts = [v for v in verts]
    cache = {}

    def mid(i, j):
        key = (min(i, j), max(i, j))
        if key not in cache:
            m = verts[i] + verts[j]
            m = m / np.linalg.norm(m)
            cache[key] = len(verts)
            verts.append(m)
        return cache[key]

    new_faces = []
    for a, b, c in faces:
        ab, bc, ca = mid(a, b), mid(b, c), mid(c, a)
        new_faces += [[a, ab, ca], [ab, b, bc], [ca, bc, c], [ab, bc, ca]]
    return np.array(verts), np.array(new_faces, dtype=np.int64)


def _mesh_hierarchy(mesh_size):
    v, f = _icosahedron()
    meshes = [(v, f)]
    for _ in range(mesh_size):
        v, f = _subdivide(v, f)
        meshes.append((v, f))
    return meshes


def _faces_to_edges(faces):
    senders = np.concatenate([faces[:, 0], faces[:, 1], faces[:, 2]])
    receivers = np.concatenate([faces[:, 1], faces[:, 2], faces[:, 0]])
    return senders, receivers


def _cart_to_lat_lon_deg(xyz):
    lat = np.rad2deg(np.arcsin(np.clip(xyz[:, 2], -1.0, 1.0)))
    lon = np.rad2deg(np.arctan2(xyz[:, 1], xyz[:, 0]))
    return lat, lon


def _lat_lon_deg_to_cart(lat, lon):
    lat = np.deg2rad(lat)
    lon = np.deg2rad(lon)
    return np.stack([np.cos(lat) * np.cos(lon),
                     np.cos(lat) * np.sin(lon),
                     np.sin(lat)], axis=-1)


def _node_geo_features(lat_deg, lon_deg):
    lat = np.deg2rad(lat_deg)
    lon = np.deg2rad(lon_deg)
    return np.stack([np.cos(lat), np.sin(lon), np.cos(lon)], -1).astype(np.float32)


def _bipartite_edge_features(s_lat, s_lon, r_lat, r_lon, senders, receivers):
    s_xyz = _lat_lon_deg_to_cart(s_lat, s_lon)[senders]
    rl = np.deg2rad(r_lat[receivers])
    ro = np.deg2rad(r_lon[receivers])
    cl, sl = np.cos(ro), np.sin(ro)
    ct, st = np.cos(rl), np.sin(rl)
    z = np.zeros_like(cl)
    o = np.ones_like(cl)
    Rz = np.stack([np.stack([cl, sl, z], -1),
                   np.stack([-sl, cl, z], -1),
                   np.stack([z, z, o], -1)], -2)
    Ry = np.stack([np.stack([ct, z, st], -1),
                   np.stack([z, o, z], -1),
                   np.stack([-st, z, ct], -1)], -2)
    R = np.einsum('eij,ejk->eik', Ry, Rz)
    s_rot = np.einsum('eij,ej->ei', R, s_xyz)
    rel = s_rot - np.array([1.0, 0.0, 0.0])
    norm = np.linalg.norm(rel, axis=-1, keepdims=True)
    max_norm = norm.max() if norm.size else 1.0
    feats = np.concatenate([norm, rel], -1) / max(max_norm, 1e-12)
    return feats.astype(np.float32)


def _radius_query(grid_lat, grid_lon, mesh_xyz, radius):
    grid_xyz = _lat_lon_deg_to_cart(grid_lat, grid_lon)
    d = np.linalg.norm(grid_xyz[:, None, :] - mesh_xyz[None, :, :], axis=-1)
    gi, mi = np.nonzero(d <= radius)
    return gi.astype(np.int64), mi.astype(np.int64)


def _in_mesh_triangle_indices(grid_lat, grid_lon, verts, faces):
    grid_xyz = _lat_lon_deg_to_cart(grid_lat, grid_lon)
    tri = verts[faces]                              # [F,3,3]
    M = np.transpose(tri, (0, 2, 1))                # columns v0,v1,v2
    Minv = np.linalg.inv(M)
    coeffs = np.einsum('fij,gj->gfi', Minv, grid_xyz)
    inside = np.all(coeffs >= -1e-9, axis=-1)       # [G,F]
    face_idx = np.argmax(inside, axis=-1)
    mesh_nodes = faces[face_idx]                    # [G,3]
    gi = np.repeat(np.arange(grid_xyz.shape[0]), 3).astype(np.int64)
    mi = mesh_nodes.reshape(-1).astype(np.int64)
    return gi, mi


# ----------------------------------------------------------------------------
# Tiling helpers
# ----------------------------------------------------------------------------
def _node_tiling(n):
    tm = min(_MLP_TM_MAX, _round_up(max(n, 8), 8))
    n_pad = _round_up(max(n, 1), tm)
    tr = tm if tm <= 256 else 256        # segment-sum receiver tile (divides n_pad)
    return tm, tr, n_pad


def _edge_tiling(e):
    te = min(_MLP_TM_MAX, _round_up(max(e, _LANE), _LANE))
    e_pad = _round_up(max(e, 1), te)
    return te, e_pad


# ----------------------------------------------------------------------------
# Fused multi-input MLP kernel:
#   y = LayerNorm?( SiLU(sum_i x_i @ W1_i + b1) @ W2 + b2 ) [+ x_0]
# ----------------------------------------------------------------------------
def _make_mlp_kernel(n_in, use_ln, add_residual, out_dtype):
    def kernel(*refs):
        xs = refs[:n_in]
        w1s = refs[n_in:2 * n_in]
        b1_ref, w2_ref, b2_ref, g_ref, bt_ref, o_ref = refs[2 * n_in:]
        h = b1_ref[...]                                         # (1, H) f32
        for x_ref, w1_ref in zip(xs, w1s):
            h = h + jnp.dot(x_ref[...], w1_ref[...],
                            preferred_element_type=jnp.float32)
        # SiLU in f32; reciprocal runs on the EUP slot
        h = h * pl.reciprocal(1.0 + jnp.exp(-h), approx=True)
        y = jnp.dot(h.astype(jnp.bfloat16), w2_ref[...],
                    preferred_element_type=jnp.float32) + b2_ref[...]
        if use_ln:
            mean = jnp.mean(y, axis=-1, keepdims=True)
            var = jnp.mean(jnp.square(y - mean), axis=-1, keepdims=True)
            y = (y - mean) * jax.lax.rsqrt(var + 1e-5)
            y = y * g_ref[...] + bt_ref[...]
        if add_residual:
            y = y + xs[0][...].astype(jnp.float32)
        o_ref[...] = y.astype(out_dtype)
    return kernel


def pallas_mlp(xs, p, tm, *, residual=False, out_dtype=jnp.bfloat16):
    """xs: list of bf16 arrays, each [Npad, Di] (batch-invariant) or [b, Npad, Di].

    Returns [b, Npad, Dout] if any input is batched, else [Npad, Dout].
    If residual=True, xs[0] is added to the output (no extra operand stream)."""
    use_ln = p["use_ln"]
    n_in = len(xs)
    assert n_in == len(p["w1s"])
    H = int(p["b1"].shape[1])
    dout = p["dout"]
    xs = [x if x.dtype == jnp.bfloat16 else x.astype(jnp.bfloat16) for x in xs]

    batched = any(x.ndim == 3 for x in xs)
    if batched:
        b = next(int(x.shape[0]) for x in xs if x.ndim == 3)
    npad = int(xs[0].shape[-2])
    assert npad % tm == 0
    if residual:
        assert int(xs[0].shape[-1]) == dout

    grid = (b, npad // tm) if batched else (npad // tm,)

    def data_spec(x):
        d = int(x.shape[-1])
        if batched and x.ndim == 3:
            return pl.BlockSpec((None, tm, d), lambda bi, i: (bi, i, 0))
        if batched:
            return pl.BlockSpec((tm, d), lambda bi, i: (i, 0))
        return pl.BlockSpec((tm, d), lambda i: (i, 0))

    def const_spec(shape):
        nz = (0,) * len(shape)
        if batched:
            return pl.BlockSpec(shape, lambda bi, i: nz)
        return pl.BlockSpec(shape, lambda i: nz)

    in_specs = [data_spec(x) for x in xs]
    in_specs += [const_spec((int(w.shape[0]), H)) for w in p["w1s"]]
    in_specs += [const_spec((1, H)),        # b1
                 const_spec((H, dout)),     # w2
                 const_spec((1, dout)),     # b2
                 const_spec((1, dout)),     # gamma
                 const_spec((1, dout))]     # beta

    if batched:
        out_shape = jax.ShapeDtypeStruct((b, npad, dout), out_dtype)
        out_spec = pl.BlockSpec((None, tm, dout), lambda bi, i: (bi, i, 0))
    else:
        out_shape = jax.ShapeDtypeStruct((npad, dout), out_dtype)
        out_spec = pl.BlockSpec((tm, dout), lambda i: (i, 0))

    return pl.pallas_call(
        _make_mlp_kernel(n_in, use_ln, residual, out_dtype),
        out_shape=out_shape,
        grid=grid,
        in_specs=in_specs,
        out_specs=out_spec,
        compiler_params=pltpu.CompilerParams(
            dimension_semantics=("parallel",) * len(grid),
            vmem_limit_bytes=_VMEM_LIMIT),
    )(*xs, *p["w1s"], p["b1"], p["w2"], p["b2"], p["g"], p["bt"])


# ----------------------------------------------------------------------------
# Sorted segment-sum (scatter-add onto receivers) — CSR-flattened step grid.
#   meta rows: [tile, edge_block, is_first, is_last, do_accumulate]
# ----------------------------------------------------------------------------
def _make_seg_sum_kernel(tr, te):
    def kernel(meta_ref, ids_ref, e_ref, o_ref, acc_ref):
        s = pl.program_id(1)

        @pl.when(meta_ref[2, s] == 1)           # first edge block of this tile
        def _init():
            acc_ref[...] = jnp.zeros_like(acc_ref)

        @pl.when(meta_ref[4, s] == 1)           # real edge block: scatter-add
        def _acc():
            local = ids_ref[...] - meta_ref[0, s] * tr                 # (1, te)
            rows = jax.lax.broadcasted_iota(jnp.int32, (tr, te), 0)    # (tr, te)
            onehot = jnp.where(rows == local,
                               jnp.bfloat16(1.0), jnp.bfloat16(0.0))   # bf16 MXU operand
            acc_ref[...] += jnp.dot(onehot, e_ref[...],
                                    preferred_element_type=jnp.float32)

        @pl.when(meta_ref[3, s] == 1)           # last edge block: single bf16 store
        def _store():
            o_ref[...] = acc_ref[...].astype(o_ref.dtype)
    return kernel


def pallas_segment_sum(edge_lat, info):
    """edge_lat: [b, E_pad, L] bf16, edges pre-sorted by receiver -> [b, R_pad, L] bf16."""
    b, e_pad, L = edge_lat.shape
    tr, te = info["TR"], info["TE"]
    return pl.pallas_call(
        _make_seg_sum_kernel(tr, te),
        out_shape=jax.ShapeDtypeStruct((b, info["R_pad"], L), jnp.bfloat16),
        grid_spec=pltpu.PrefetchScalarGridSpec(
            num_scalar_prefetch=1,
            grid=(b, info["n_steps"]),
            in_specs=[
                pl.BlockSpec((1, te), lambda bi, s, meta: (0, meta[1, s])),
                pl.BlockSpec((None, te, L), lambda bi, s, meta: (bi, meta[1, s], 0)),
            ],
            out_specs=pl.BlockSpec((None, tr, L),
                                   lambda bi, s, meta: (bi, meta[0, s], 0)),
            scratch_shapes=[pltpu.VMEM((tr, L), jnp.float32)]),
        compiler_params=pltpu.CompilerParams(
            dimension_semantics=("parallel", "arbitrary"),
            vmem_limit_bytes=_VMEM_LIMIT),
    )(info["meta"], info["ids"], edge_lat)


def _build_segment_info(recv_sorted, num_recv, r_pad, tr, e_pad, te):
    """CSR step list of (receiver-tile, edge-block) pairs for the segment-sum kernel."""
    E = int(recv_sorted.shape[0])
    n_recv_tiles = r_pad // tr
    ids = np.full((1, e_pad), r_pad, np.int32)      # sentinel never matches a row
    ids[0, :E] = recv_sorted.astype(np.int32)
    tile_lo = np.searchsorted(recv_sorted, np.arange(n_recv_tiles) * tr, side="left")
    tile_hi = np.searchsorted(recv_sorted, (np.arange(n_recv_tiles) + 1) * tr, side="left")
    steps = []
    for t in range(n_recv_tiles):
        if tile_hi[t] <= tile_lo[t]:                # empty tile -> init + store zeros
            steps.append((t, 0, 1, 1, 0))
        else:
            lo_b = int(tile_lo[t]) // te
            hi_b = -(-int(tile_hi[t]) // te)        # ceil, exclusive
            for k, blk in enumerate(range(lo_b, hi_b)):
                steps.append((t, blk, int(k == 0), int(blk == hi_b - 1), 1))
    meta = np.asarray(steps, np.int32).T            # [5, n_steps], long axis last
    return dict(meta=jnp.asarray(meta), ids=jnp.asarray(ids),
                R_pad=int(r_pad), E_pad=int(e_pad), TR=int(tr), TE=int(te),
                n_steps=int(meta.shape[1]))


# ----------------------------------------------------------------------------
# Parameters
# ----------------------------------------------------------------------------
def _make_mlp_params(key, din, dh, dout):
    k1, k2 = jax.random.split(key)
    w1 = jax.random.normal(k1, (din, dh), jnp.float32) / np.sqrt(din)
    b1 = jnp.zeros((dh,), jnp.float32)
    w2 = jax.random.normal(k2, (dh, dout), jnp.float32) / np.sqrt(dh)
    b2 = jnp.zeros((dout,), jnp.float32)
    g = jnp.ones((dout,), jnp.float32)
    bt = jnp.zeros((dout,), jnp.float32)
    return (w1, b1, w2, b2, g, bt)


def _prep_mlp(raw, splits, use_ln):
    """Pre-split W1 by K-slices (concat order), pre-cast MXU operands to bf16."""
    w1, b1, w2, b2, g, bt = raw
    H = int(w1.shape[1])
    dout = int(w2.shape[1])
    assert H % _LANE == 0
    if use_ln:
        assert dout % _LANE == 0, "LayerNorm output dim must be lane-aligned"
    w1s, off = [], 0
    for s in splits:
        w1s.append(jnp.asarray(w1[off:off + s], jnp.bfloat16))
        off += s
    assert off == int(w1.shape[0])
    return dict(
        w1s=w1s,
        b1=jnp.asarray(b1, jnp.float32).reshape(1, H),
        w2=jnp.asarray(w2, jnp.bfloat16),
        b2=jnp.asarray(b2, jnp.float32).reshape(1, dout),
        g=jnp.asarray(g, jnp.float32).reshape(1, dout),
        bt=jnp.asarray(bt, jnp.float32).reshape(1, dout),
        dout=dout, use_ln=bool(use_ln))


# ----------------------------------------------------------------------------
# GraphCastBase (Pallas)
# ----------------------------------------------------------------------------
class GraphCastBasePallas:
    def __init__(self, latitudes, longitudes, in_dim=16, out_dim=16,
                 mesh_size=2, latent_size=128,
                 radius_query_fraction_edge_length=0.6, key=None):
        assert latent_size % _LANE == 0
        self.latitudes = np.asarray(latitudes, dtype=np.float32)
        self.longitudes = np.asarray(longitudes, dtype=np.float32)
        self.in_dim, self.out_dim, self.latent_size = in_dim, out_dim, latent_size

        # --- meshes / grids (GraphBase._init_meshes / _init_grids) ---
        meshes = _mesh_hierarchy(mesh_size)
        mesh_v, mesh_f = meshes[-1]
        self.num_mesh_nodes = mesh_v.shape[0]
        m_lat, m_lon = _cart_to_lat_lon_deg(mesh_v)
        # NOTE: np.meshgrid(lat, lon) default 'xy' indexing, flattened — reproduces
        # the original module's ordering verbatim.
        g_lat, g_lon = np.meshgrid(self.latitudes, self.longitudes)
        g_lat = g_lat.flatten().astype(np.float32)
        g_lon = g_lon.flatten().astype(np.float32)
        self.num_grid_nodes = g_lat.shape[0]
        G, M = self.num_grid_nodes, self.num_mesh_nodes

        s, r = _faces_to_edges(mesh_f)
        max_edge = np.linalg.norm(mesh_v[s] - mesh_v[r], axis=-1).max()
        radius = max_edge * radius_query_fraction_edge_length

        # --- grid2mesh graph (encoder buffers), edges sorted by mesh receiver ---
        g2m_g, g2m_m = _radius_query(g_lat, g_lon, mesh_v, radius)
        order = np.argsort(g2m_m, kind="stable")
        g2m_g, g2m_m = g2m_g[order], g2m_m[order]
        Eg = int(g2m_g.shape[0])

        # --- mesh2grid graph (decoder buffers), edges sorted by grid receiver ---
        m2g_g, m2g_m = _in_mesh_triangle_indices(g_lat, g_lon, mesh_v, mesh_f)
        order = np.argsort(m2g_g, kind="stable")
        m2g_g, m2g_m = m2g_g[order], m2g_m[order]
        Em = int(m2g_g.shape[0])

        # --- tilings / paddings (shared between MLPs and segment-sum) ---
        self.tmG, self.trG, self.G_pad = _node_tiling(G)
        self.tmM, self.trM, self.M_pad = _node_tiling(M)
        self.teg, self.Eg_pad = _edge_tiling(Eg)
        self.tem, self.Em_pad = _edge_tiling(Em)

        self.g2m_agg = _build_segment_info(g2m_m, M, self.M_pad, self.trM,
                                           self.Eg_pad, self.teg)
        self.m2g_agg = _build_segment_info(m2g_g, G, self.G_pad, self.trG,
                                           self.Em_pad, self.tem)

        # --- padded constant features & indices ---
        def _pad_rows(a, n_pad):
            return np.pad(a, ((0, n_pad - a.shape[0]), (0, 0)))

        grid_geo = _node_geo_features(g_lat, g_lon)                       # [G,3]
        mesh_geo = _node_geo_features(m_lat, m_lon)                       # [M,3]
        g2m_ef = _bipartite_edge_features(g_lat, g_lon, m_lat, m_lon, g2m_g, g2m_m)
        m2g_ef = _bipartite_edge_features(m_lat, m_lon, g_lat, g_lon, m2g_m, m2g_g)

        self.grid_geo_pad = jnp.asarray(_pad_rows(grid_geo, self.G_pad), jnp.bfloat16)
        mesh_geo_pad = jnp.asarray(_pad_rows(mesh_geo, self.M_pad), jnp.bfloat16)
        g2m_ef_pad = jnp.asarray(_pad_rows(g2m_ef, self.Eg_pad), jnp.bfloat16)
        m2g_ef_pad = jnp.asarray(_pad_rows(m2g_ef, self.Em_pad), jnp.bfloat16)

        def _pad_idx(idx, n_pad):
            out = np.zeros((n_pad,), np.int32)
            out[:idx.shape[0]] = idx.astype(np.int32)
            return jnp.asarray(out)

        self.g2m_senders = _pad_idx(g2m_g, self.Eg_pad)    # grid node indices
        g2m_receivers = _pad_idx(g2m_m, self.Eg_pad)       # mesh node indices (const gather)
        self.m2g_senders = _pad_idx(m2g_m, self.Em_pad)    # mesh node indices
        self.m2g_receivers = _pad_idx(m2g_g, self.Em_pad)  # grid node indices

        # --- parameters (deterministic), pre-split / pre-cast once ---
        key = jax.random.PRNGKey(0) if key is None else key
        ks = jax.random.split(key, 10)
        L = latent_size
        raw = {
            # Grid2MeshEncoder (use_layer_norm=True)
            "enc_grid_embed": (_make_mlp_params(ks[0], in_dim + 3, L, L), [in_dim, 3], True),
            "enc_mesh_embed": (_make_mlp_params(ks[1], 3, L, L), [3], True),
            "enc_edge_embed": (_make_mlp_params(ks[2], 4, L, L), [4], True),
            "enc_proc_edge":  (_make_mlp_params(ks[3], 3 * L, L, L), [L, L, L], True),
            "enc_proc_mesh":  (_make_mlp_params(ks[4], 2 * L, L, L), [L, L], True),
            "enc_proc_grid":  (_make_mlp_params(ks[5], L, L, L), [L], True),
            # Mesh2GridDecoder (use_layer_norm=False)
            "dec_edge_embed": (_make_mlp_params(ks[6], 4, L, L), [4], False),
            "dec_proc_edge":  (_make_mlp_params(ks[7], 3 * L, L, L), [L, L, L], False),
            "dec_proc_grid":  (_make_mlp_params(ks[8], 2 * L, L, L), [L, L], False),
            "dec_out":        (_make_mlp_params(ks[9], L, L, out_dim), [L], False),
        }
        self.params = {name: _prep_mlp(p, splits, ln)
                       for name, (p, splits, ln) in raw.items()}

        # --- batch-invariant embeddings hoisted out of forward (bf16, padded) ---
        self.mesh_lat0 = pallas_mlp([mesh_geo_pad],
                                    self.params["enc_mesh_embed"], self.tmM)   # [M_pad,L]
        self.e_g2m0 = pallas_mlp([g2m_ef_pad],
                                 self.params["enc_edge_embed"], self.teg)      # [Eg_pad,L]
        self.e_m2g0 = pallas_mlp([m2g_ef_pad],
                                 self.params["dec_edge_embed"], self.tem)      # [Em_pad,L]
        # Encoder receiver side is the constant mesh embedding -> constant gather.
        self.rcv_g2m0 = jnp.take(self.mesh_lat0, g2m_receivers, axis=0)        # [Eg_pad,L]

        self._forward_jit = jax.jit(self._forward)

    # ---- forward ----
    def _forward(self, x):
        # x: [b, n_lat, n_lon, in_dim]
        b, n_lat, n_lon, _ = x.shape
        G = self.num_grid_nodes

        grid = x.reshape(b, G, -1)
        grid = jnp.pad(grid, ((0, 0), (0, self.G_pad - G), (0, 0))).astype(jnp.bfloat16)

        # grid node embedding (geo features folded in as a second K-slice)
        grid_lat = pallas_mlp([grid, self.grid_geo_pad],
                              self.params["enc_grid_embed"], self.tmG)         # [b,Gp,L]

        # --- encoder: grid -> mesh interaction (1 processing layer, residual) ---
        # TODO(synk): fuse the sender gather into the edge MLP via per-tile DMA gathers.
        snd = jnp.take(grid_lat, self.g2m_senders, axis=1)                     # [b,Egp,L]
        e_lat = pallas_mlp([self.e_g2m0, snd, self.rcv_g2m0],
                           self.params["enc_proc_edge"], self.teg, residual=True)
        agg = pallas_segment_sum(e_lat, self.g2m_agg)                          # [b,Mp,L]
        mesh_lat = pallas_mlp([self.mesh_lat0, agg],
                              self.params["enc_proc_mesh"], self.tmM, residual=True)
        grid_lat = pallas_mlp([grid_lat], self.params["enc_proc_grid"],
                              self.tmG, residual=True)

        # --- decoder: mesh -> grid interaction + readout (no layer norm) ---
        snd2 = jnp.take(mesh_lat, self.m2g_senders, axis=1)                    # [b,Emp,L]
        rcv2 = jnp.take(grid_lat, self.m2g_receivers, axis=1)                  # [b,Emp,L]
        e2 = pallas_mlp([self.e_m2g0, snd2, rcv2],
                        self.params["dec_proc_edge"], self.tem, residual=True)
        agg2 = pallas_segment_sum(e2, self.m2g_agg)                            # [b,Gp,L]
        grid_lat = pallas_mlp([grid_lat, agg2], self.params["dec_proc_grid"],
                              self.tmG, residual=True)
        out = pallas_mlp([grid_lat], self.params["dec_out"], self.tmG,
                         out_dtype=jnp.float32)                                # [b,Gp,out]

        # --- restore_shape: [b, G, C] -> [b, C, n_lat, n_lon] ---
        out = out[:, :G].reshape(b, n_lat, n_lon, -1)
        return jnp.transpose(out, (0, 3, 1, 2))

    def __call__(self, x):
        return self._forward_jit(x)


if __name__ == "__main__":
    # Small deterministic configuration
    latitudes = np.linspace(-80.0, 80.0, 8)
    longitudes = np.linspace(0.0, 337.5, 16)
    B, IN_DIM, OUT_DIM = 2, 16, 16

    model = GraphCastBasePallas(latitudes, longitudes,
                                in_dim=IN_DIM, out_dim=OUT_DIM,
                                mesh_size=2, latent_size=128,
                                key=jax.random.PRNGKey(42))

    x = jax.random.normal(jax.random.PRNGKey(0),
                          (B, len(latitudes), len(longitudes), IN_DIM),
                          dtype=jnp.float32)

    y = model(x)
    y = jax.block_until_ready(y)
    assert y.shape == (B, OUT_DIM, len(latitudes), len(longitudes)), y.shape
    assert bool(jnp.all(jnp.isfinite(y)))
    print("KERNEL_OK")
</pallas_src>

<mosaic_0001>
module attributes {stable_mosaic.version = 11 : i64} {
  func.func @kernel(%arg0: i32, %arg1: memref<168x3xbf16, #tpu.memory_space<vmem>>, %arg2: memref<3x128xbf16, #tpu.memory_space<vmem>>, %arg3: memref<1x128xf32, #tpu.memory_space<vmem>>, %arg4: memref<128x128xbf16, #tpu.memory_space<vmem>>, %arg5: memref<1x128xf32, #tpu.memory_space<vmem>>, %arg6: memref<1x128xf32, #tpu.memory_space<vmem>>, %arg7: memref<1x128xf32, #tpu.memory_space<vmem>>, %arg8: memref<168x128xbf16, #tpu.memory_space<vmem>>) attributes {dimension_semantics = [#tpu.dimension_semantics<parallel>], iteration_bounds = array<i64: 1>, scalar_prefetch = 0 : i64, scratch_operands = 0 : i64, tpu.core_type = #tpu.core_type<tc>, window_params = [{transform_indices = @transform_0, window_bounds = array<i64: 168, 3>}, {pipeline_mode = #tpu.pipeline_mode<synchronous>, transform_indices = @transform_1, window_bounds = array<i64: 3, 128>}, {pipeline_mode = #tpu.pipeline_mode<synchronous>, transform_indices = @transform_2, window_bounds = array<i64: 1, 128>}, {pipeline_mode = #tpu.pipeline_mode<synchronous>, transform_indices = @transform_3, window_bounds = array<i64: 128, 128>}, {pipeline_mode = #tpu.pipeline_mode<synchronous>, transform_indices = @transform_4, window_bounds = array<i64: 1, 128>}, {pipeline_mode = #tpu.pipeline_mode<synchronous>, transform_indices = @transform_5, window_bounds = array<i64: 1, 128>}, {pipeline_mode = #tpu.pipeline_mode<synchronous>, transform_indices = @transform_6, window_bounds = array<i64: 1, 128>}, {transform_indices = @transform_7, window_bounds = array<i64: 168, 128>}]} {
    %c0 = arith.constant 0 : index
    %c0_0 = arith.constant 0 : index
    %0 = vector.load %arg3[%c0, %c0_0] : memref<1x128xf32, #tpu.memory_space<vmem>>, vector<1x128xf32>
    %c0_1 = arith.constant 0 : index
    %c0_2 = arith.constant 0 : index
    %1 = vector.load %arg1[%c0_1, %c0_2] : memref<168x3xbf16, #tpu.memory_space<vmem>>, vector<168x3xbf16>
    %c0_3 = arith.constant 0 : index
    %c0_4 = arith.constant 0 : index
    %2 = vector.load %arg2[%c0_3, %c0_4] : memref<3x128xbf16, #tpu.memory_space<vmem>>, vector<3x128xbf16>
    %cst = arith.constant dense<0.000000e+00> : vector<168x128xf32>
    %3 = tpu.matmul %1, %2, %cst {dimension_numbers = #tpu.dot_dimension_numbers<[1], [0], [0], [1], [0, 0, 1, 1], [], []>} : vector<168x3xbf16>, vector<3x128xbf16>, vector<168x128xf32> -> vector<168x128xf32>
    %4 = vector.broadcast %0 : vector<1x128xf32> to vector<168x128xf32>
    %5 = arith.addf %4, %3 : vector<168x128xf32>
    %cst_5 = arith.constant 0.000000e+00 : f32
    %6 = vector.broadcast %cst_5 : f32 to vector<168x128xf32>
    %7 = arith.subf %6, %5 : vector<168x128xf32>
    %8 = math.exp %7 : vector<168x128xf32>
    %cst_6 = arith.constant 1.000000e+00 : f32
    %9 = vector.broadcast %cst_6 : f32 to vector<168x128xf32>
    %10 = arith.addf %9, %8 : vector<168x128xf32>
    %11 = tpu.reciprocal %10 {approx = true} : vector<168x128xf32> -> vector<168x128xf32>
    %12 = arith.mulf %5, %11 : vector<168x128xf32>
    %13 = arith.truncf %12 : vector<168x128xf32> to vector<168x128xbf16>
    %c0_7 = arith.constant 0 : index
    %c0_8 = arith.constant 0 : index
    %14 = vector.load %arg4[%c0_7, %c0_8] : memref<128x128xbf16, #tpu.memory_space<vmem>>, vector<128x128xbf16>
    %cst_9 = arith.constant dense<0.000000e+00> : vector<168x128xf32>
    %15 = tpu.matmul %13, %14, %cst_9 {dimension_numbers = #tpu.dot_dimension_numbers<[1], [0], [0], [1], [0, 0, 1, 1], [], []>} : vector<168x128xbf16>, vector<128x128xbf16>, vector<168x128xf32> -> vector<168x128xf32>
    %c0_10 = arith.constant 0 : index
    %c0_11 = arith.constant 0 : index
    %16 = vector.load %arg5[%c0_10, %c0_11] : memref<1x128xf32, #tpu.memory_space<vmem>>, vector<1x128xf32>
    %17 = vector.broadcast %16 : vector<1x128xf32> to vector<168x128xf32>
    %18 = arith.addf %15, %17 : vector<168x128xf32>
    %cst_12 = arith.constant dense<0.000000e+00> : vector<168xf32>
    %19 = vector.multi_reduction <add>, %18, %cst_12 [1] : vector<168x128xf32> to vector<168xf32>
    %20 = vector.shape_cast %19 : vector<168xf32> to vector<168x1xf32>
    %cst_13 = arith.constant 1.280000e+02 : f32
    %21 = vector.broadcast %cst_13 : f32 to vector<168x1xf32>
    %22 = arith.divf %20, %21 : vector<168x1xf32>
    %23 = vector.broadcast %22 : vector<168x1xf32> to vector<168x128xf32>
    %24 = arith.subf %18, %23 : vector<168x128xf32>
    %25 = arith.mulf %24, %24 : vector<168x128xf32>
    %cst_14 = arith.constant dense<0.000000e+00> : vector<168xf32>
    %26 = vector.multi_reduction <add>, %25, %cst_14 [1] : vector<168x128xf32> to vector<168xf32>
    %27 = vector.shape_cast %26 : vector<168xf32> to vector<168x1xf32>
    %cst_15 = arith.constant 1.280000e+02 : f32
    %28 = vector.broadcast %cst_15 : f32 to vector<168x1xf32>
    %29 = arith.divf %27, %28 : vector<168x1xf32>
    %30 = vector.broadcast %22 : vector<168x1xf32> to vector<168x128xf32>
    %31 = arith.subf %18, %30 : vector<168x128xf32>
    %cst_16 = arith.constant 9.99999974E-6 : f32
    %32 = vector.broadcast %cst_16 : f32 to vector<168x1xf32>
    %33 = arith.addf %29, %32 : vector<168x1xf32>
    %34 = math.rsqrt %33 : vector<168x1xf32>
    %35 = vector.broadcast %34 : vector<168x1xf32> to vector<168x128xf32>
    %36 = arith.mulf %31, %35 : vector<168x128xf32>
    %c0_17 = arith.constant 0 : index
    %c0_18 = arith.constant 0 : index
    %37 = vector.load %arg6[%c0_17, %c0_18] : memref<1x128xf32, #tpu.memory_space<vmem>>, vector<1x128xf32>
    %38 = vector.broadcast %37 : vector<1x128xf32> to vector<168x128xf32>
    %39 = arith.mulf %36, %38 : vector<168x128xf32>
    %c0_19 = arith.constant 0 : index
    %c0_20 = arith.constant 0 : index
    %40 = vector.load %arg7[%c0_19, %c0_20] : memref<1x128xf32, #tpu.memory_space<vmem>>, vector<1x128xf32>
    %41 = vector.broadcast %40 : vector<1x128xf32> to vector<168x128xf32>
    %42 = arith.addf %39, %41 : vector<168x128xf32>
    %43 = arith.truncf %42 : vector<168x128xf32> to vector<168x128xbf16>
    %c0_21 = arith.constant 0 : index
    %c0_22 = arith.constant 0 : index
    %44 = vector.load %arg8[%c0_21, %c0_22] : memref<168x128xbf16, #tpu.memory_space<vmem>>, vector<168x128xbf16>
    tpu.vector_store %arg8[%c0_21, %c0_22], %43 {strides = array<i32>} : memref<168x128xbf16, #tpu.memory_space<vmem>>, vector<168x128xbf16>,
    return
  }
  func.func @transform_0(%arg0: i32) -> (i32, i32) {
    %c0_i32 = arith.constant 0 : i32
    %c0_i32_0 = arith.constant 0 : i32
    return %arg0, %c0_i32 : i32, i32
  }
  func.func @transform_1(%arg0: i32) -> (i32, i32) {
    %c0_i32 = arith.constant 0 : i32
    %c0_i32_0 = arith.constant 0 : i32
    %c0_i32_1 = arith.constant 0 : i32
    return %c0_i32, %c0_i32_0 : i32, i32
  }
  func.func @transform_2(%arg0: i32) -> (i32, i32) {
    %c0_i32 = arith.constant 0 : i32
    %c0_i32_0 = arith.constant 0 : i32
    %c0_i32_1 = arith.constant 0 : i32
    return %c0_i32, %c0_i32_0 : i32, i32
  }
  func.func @transform_3(%arg0: i32) -> (i32, i32) {
    %c0_i32 = arith.constant 0 : i32
    %c0_i32_0 = arith.constant 0 : i32
    %c0_i32_1 = arith.constant 0 : i32
    return %c0_i32, %c0_i32_0 : i32, i32
  }
  func.func @transform_4(%arg0: i32) -> (i32, i32) {
    %c0_i32 = arith.constant 0 : i32
    %c0_i32_0 = arith.constant 0 : i32
    %c0_i32_1 = arith.constant 0 : i32
    return %c0_i32, %c0_i32_0 : i32, i32
  }
  func.func @transform_5(%arg0: i32) -> (i32, i32) {
    %c0_i32 = arith.constant 0 : i32
    %c0_i32_0 = arith.constant 0 : i32
    %c0_i32_1 = arith.constant 0 : i32
    return %c0_i32, %c0_i32_0 : i32, i32
  }
  func.func @transform_6(%arg0: i32) -> (i32, i32) {
    %c0_i32 = arith.constant 0 : i32
    %c0_i32_0 = arith.constant 0 : i32
    %c0_i32_1 = arith.constant 0 : i32
    return %c0_i32, %c0_i32_0 : i32, i32
  }
  func.func @transform_7(%arg0: i32) -> (i32, i32) {
    %c0_i32 = arith.constant 0 : i32
    %c0_i32_0 = arith.constant 0 : i32
    return %arg0, %c0_i32 : i32, i32
  }
}

</mosaic_0001>

<llo_original>
// kernel: tpu_custom_call.1
$region0: #{tpu_custom_call.1}
  #allocation0 [shape = 'u32[]', space=smem, size = 0x4, offset = 0x4, fixed_abs, tag = 'smem constant byte address 0x4 - core index']
  #allocation1 [shape = 'u32[144,128]{1,0:T(1,128)}', space=vmem, size = 0x12000, scoped, tag = 'internal scratch']
  %s0 = inlined_call_operand.vmem [shape: bf16[168,3], index: 0, kind: input, shape index: {}]
  %s1 = inlined_call_operand.vmem [shape: bf16[3,128], index: 1, kind: input, shape index: {}]
  %s2 = inlined_call_operand.vmem [shape: f32[1,128], index: 2, kind: input, shape index: {}]
  %s3 = inlined_call_operand.vmem [shape: bf16[128,128], index: 3, kind: input, shape index: {}]
  %s4 = inlined_call_operand.vmem [shape: f32[1,128], index: 4, kind: input, shape index: {}]
  %s5 = inlined_call_operand.vmem [shape: f32[1,128], index: 5, kind: input, shape index: {}]
  %s6 = inlined_call_operand.vmem [shape: f32[1,128], index: 6, kind: input, shape index: {}]
  %s7 = inlined_call_operand.hbm [shape: bf16[168,128], index: 7, kind: output, shape index: {}]
  %s8 = sld [smem:[#allocation0]]
  $region38: #{tpu_custom_call.1} parent=0
    _
  %s10 = ssub.s32 1, %s8
  %s11 = scalar_select 0, %s10, %s8
  $region1: #{tpu_custom_call.1} parent=0
    #allocation2 [shape = 'u8[43008]{0}', space=vmem, size = 0xa800, scoped, tag = 'output window, operand 0, single buffered']
    #allocation3 [shape = 's32[1]{0}', space=sflag, size = 0x4, scoped, tag = 'scoped memory for tpu_custom_call.1']
    %12 = vsyncpa [#allocation3], 0
    // Predicated region
    $region2: #{tpu_custom_call.1} parent=1 // pred_check
      _
    $region3: #{tpu_custom_call.1} parent=1 // pred_check_branch
      %14 = sbr.rel (0) target = $region5
    $region4: #{tpu_custom_call.1} parent=1 // pred_region
      _
    $region5: #{tpu_custom_call.1} parent=1 // pred_fallthru
      _
    // Predicated region
    $region6: #{tpu_custom_call.1} parent=1 // pred_check
      _
    $region7: #{tpu_custom_call.1} parent=1 // pred_check_branch
      %16 = sbr.rel (0) target = $region9
    $region8: #{tpu_custom_call.1} parent=1 // pred_region
      _
    $region9: #{tpu_custom_call.1} parent=1 // pred_fallthru
      _
    // Predicated region
    $region10: #{tpu_custom_call.1} parent=1 // pred_check
      _
    $region11: #{tpu_custom_call.1} parent=1 // pred_check_branch
      %18 = sbr.rel (0) target = $region13
    $region12: #{tpu_custom_call.1} parent=1 // pred_region
      _
    $region13: #{tpu_custom_call.1} parent=1 // pred_fallthru
      _
    // Predicated region
    $region14: #{tpu_custom_call.1} parent=1 // pred_check
      _
    $region15: #{tpu_custom_call.1} parent=1 // pred_check_branch
      %20 = sbr.rel (0) target = $region17
    $region16: #{tpu_custom_call.1} parent=1 // pred_region
      _
    $region17: #{tpu_custom_call.1} parent=1 // pred_fallthru
      _
    // Predicated region
    $region18: #{tpu_custom_call.1} parent=1 // pred_check
      _
    $region19: #{tpu_custom_call.1} parent=1 // pred_check_branch
      %22 = sbr.rel (0) target = $region21
    $region20: #{tpu_custom_call.1} parent=1 // pred_region
      _
    $region21: #{tpu_custom_call.1} parent=1 // pred_fallthru
      _
    // Predicated region
    $region22: #{tpu_custom_call.1} parent=1 // pred_check
      _
    $region23: #{tpu_custom_call.1} parent=1 // pred_check_branch
      %24 = sbr.rel (0) target = $region25
    $region24: #{tpu_custom_call.1} parent=1 // pred_region
      _
    $region25: #{tpu_custom_call.1} parent=1 // pred_fallthru
      _
    // Predicated region
    $region26: #{tpu_custom_call.1} parent=1 // pred_check
      _
    $region27: #{tpu_custom_call.1} parent=1 // pred_check_branch
      %26 = sbr.rel (0) target = $region29
    $region28: #{tpu_custom_call.1} parent=1 // pred_region
      _
    $region29: #{tpu_custom_call.1} parent=1 // pred_fallthru
      _
    %v28 = vld [vmem:[%s2] sm:$0x1]
    %v29 = vld [vmem:[%s0] sm:$0xf]
    %v30 = vld [vmem:[%s0 + $0x4] sm:$0xf]
    %v31 = vld [vmem:[%s0 + $0x8] sm:$0xf]
    %v32 = vld [vmem:[%s0 + $0xc] sm:$0xf]
    %v33 = vld [vmem:[%s0 + $0x10] sm:$0xf]
    %v34 = vld [vmem:[%s0 + $0x14] sm:$0xf]
    %v35 = vld [vmem:[%s0 + $0x18] sm:$0xf]
    %v36 = vld [vmem:[%s0 + $0x1c] sm:$0xf]
    %v37 = vld [vmem:[%s0 + $0x20] sm:$0xf]
    %v38 = vld [vmem:[%s0 + $0x24] sm:$0xf]
    %v39 = vld [vmem:[%s0 + $0x28] sm:$0xf]
    %v40 = vld [vmem:[%s0 + $0x2c] sm:$0xf]
    %v41 = vld [vmem:[%s0 + $0x30] sm:$0xf]
    %v42 = vld [vmem:[%s0 + $0x34] sm:$0xf]
    %v43 = vld [vmem:[%s0 + $0x38] sm:$0xf]
    %v44 = vld [vmem:[%s0 + $0x3c] sm:$0xf]
    %v45 = vld [vmem:[%s0 + $0x40] sm:$0xf]
    %v46 = vld [vmem:[%s0 + $0x44] sm:$0xf]
    %v47 = vld [vmem:[%s0 + $0x48] sm:$0xf]
    %v48 = vld [vmem:[%s0 + $0x4c] sm:$0xf]
    %v49 = vld [vmem:[%s0 + $0x50] sm:$0xf]
    %v50 = vld [vmem:[%s1] sm:$0x3]
    %v72 = vunpack.c.l.b16 %v29
    %v73 = vunpack.c.l.b16 %v30
    %v74 = vunpack.c.l.b16 %v31
    %v75 = vunpack.c.l.b16 %v32
    %v76 = vunpack.c.l.b16 %v33
    %v77 = vunpack.c.l.b16 %v34
    %v78 = vunpack.c.l.b16 %v35
    %v79 = vunpack.c.l.b16 %v36
    %v80 = vunpack.c.l.b16 %v37
    %v81 = vunpack.c.l.b16 %v38
    %v82 = vunpack.c.l.b16 %v39
    %v83 = vunpack.c.l.b16 %v40
    %v84 = vunpack.c.l.b16 %v41
    %v85 = vunpack.c.l.b16 %v42
    %v86 = vunpack.c.l.b16 %v43
    %v87 = vunpack.c.l.b16 %v44
    %v88 = vunpack.c.l.b16 %v45
    %v89 = vunpack.c.l.b16 %v46
    %v90 = vunpack.c.l.b16 %v47
    %v91 = vunpack.c.l.b16 %v48
    %v92 = vunpack.c.l.b16 %v49
    %v93 = vpack.c.b16 %v73, %v72
    %v94 = vpack.c.b16 %v75, %v74
    %v95 = vpack.c.b16 %v77, %v76
    %v96 = vpack.c.b16 %v79, %v78
    %v97 = vpack.c.b16 %v81, %v80
    %v98 = vpack.c.b16 %v83, %v82
    %v99 = vpack.c.b16 %v85, %v84
    %v100 = vpack.c.b16 %v87, %v86
    %v101 = vpack.c.b16 %v89, %v88
    %v102 = vpack.c.b16 %v91, %v90
    %v103 = vpack.c.b16 %v92, %v92
    %vm104 = vcmask 23552
    %v106 = vsel %vm104, %v93, 0
    %v109 = vsel %vm104, %v94, 0
    %v112 = vsel %vm104, %v95, 0
    %v115 = vsel %vm104, %v96, 0
    %v118 = vsel %vm104, %v97, 0
    %v121 = vsel %vm104, %v98, 0
    %v124 = vsel %vm104, %v99, 0
    %v127 = vsel %vm104, %v100, 0
    %v130 = vsel %vm104, %v101, 0
    %v133 = vsel %vm104, %v102, 0
    %v136 = vsel %vm104, %v103, 0
    %vm138 = vcmask 1040384
    %vm139 = vcmask 1041408
    %v140 = vsel %vm138, 4294967295, 65535
    %v141 = vsel %vm139, %v140, 0
    %v143 = vand.u32 %v50, %v141
    %145 = vmatprep.subr.bf16.mxu0 0
    %146 = vmatpush1.bf16.msra.mxu0 0
    %147 = vmatprep.subr.bf16.mxu0 0
    %148 = vmatpush1.bf16.msra.mxu0 0
    %149 = vmatprep.subr.bf16.mxu0 0
    %150 = vmatpush1.bf16.msra.mxu0 0
    %151 = vmatprep.subr.bf16.mxu0 0
    %152 = vmatpush1.bf16.msra.mxu0 0
    %153 = vmatprep.subr.bf16.mxu0 0
    %154 = vmatpush1.bf16.msra.mxu0 0
    %155 = vmatprep.subr.bf16.mxu0 0
    %156 = vmatpush1.bf16.msra.mxu0 0
    %157 = vmatprep.subr.bf16.mxu0 0
    %158 = vmatpush1.bf16.msra.mxu0 0
    %159 = vmatprep.subr.bf16.mxu0 0
    %160 = vmatpush1.bf16.msra.mxu0 %v143
    %161 = vmatprep.subr.bf16.mxu0 0
    %162 = vmatpush2.bf16.msra.mxu0 0
    %163 = vmatprep.subr.bf16.mxu0 0
    %164 = vmatpush2.bf16.msra.mxu0 0
    %165 = vmatprep.subr.bf16.mxu0 0
    %166 = vmatpush2.bf16.msra.mxu0 0
    %167 = vmatprep.subr.bf16.mxu0 0
    %168 = vmatpush2.bf16.msra.mxu0 0
    %169 = vmatprep.subr.bf16.mxu0 0
    %170 = vmatpush2.bf16.msra.mxu0 0
    %171 = vmatprep.subr.bf16.mxu0 0
    %172 = vmatpush2.bf16.msra.mxu0 0
    %173 = vmatprep.subr.bf16.mxu0 0
    %174 = vmatpush2.bf16.msra.mxu0 0
    %175 = vmatprep.subr.bf16.mxu0 0
    %176 = vmatpush2.bf16.msra.mxu0 0
    %177 = vmatprep.mubr.bf16.mxu0 0
    %178 = vmatmul.mubr.bf16.gmra.mxu0 %v106
    %v179 = vpop.f32.mrf.mxu0
    %v180 = vadd.f32 0.0, %v179
    %v181 = vpop.f32.mrf.mxu0
    %v182 = vpop.f32.mrf.mxu0
    %v183 = vadd.f32 0.0, %v182
    %v184 = vpop.f32.mrf.mxu0
    %185 = vmatprep.mubr.bf16.mxu0 0
    %186 = vmatmul.mubr.bf16.gmra.mxu0 %v109
    %v187 = vpop.f32.mrf.mxu0
    %v188 = vadd.f32 0.0, %v187
    %v189 = vpop.f32.mrf.mxu0
    %v190 = vpop.f32.mrf.mxu0
    %v191 = vadd.f32 0.0, %v190
    %v192 = vpop.f32.mrf.mxu0
    %193 = vmatprep.mubr.bf16.mxu0 0
    %194 = vmatmul.mubr.bf16.gmra.mxu0 %v112
    %v195 = vpop.f32.mrf.mxu0
    %v196 = vadd.f32 0.0, %v195
    %v197 = vpop.f32.mrf.mxu0
    %v198 = vpop.f32.mrf.mxu0
    %v199 = vadd.f32 0.0, %v198
    %v200 = vpop.f32.mrf.mxu0
    %201 = vmatprep.mubr.bf16.mxu0 0
    %202 = vmatmul.mubr.bf16.gmra.mxu0 %v115
    %v203 = vpop.f32.mrf.mxu0
    %v204 = vadd.f32 0.0, %v203
    %v205 = vpop.f32.mrf.mxu0
    %v206 = vpop.f32.mrf.mxu0
    %v207 = vadd.f32 0.0, %v206
    %v208 = vpop.f32.mrf.mxu0
    %209 = vmatprep.mubr.bf16.mxu0 0
    %210 = vmatmul.mubr.bf16.gmra.mxu0 %v118
    %v211 = vpop.f32.mrf.mxu0
    %v212 = vadd.f32 0.0, %v211
    %v213 = vpop.f32.mrf.mxu0
    %v214 = vpop.f32.mrf.mxu0
    %v215 = vadd.f32 0.0, %v214
    %v216 = vpop.f32.mrf.mxu0
    %217 = vmatprep.mubr.bf16.mxu0 0
    %218 = vmatmul.mubr.bf16.gmra.mxu0 %v121
    %v219 = vpop.f32.mrf.mxu0
    %v220 = vadd.f32 0.0, %v219
    %v221 = vpop.f32.mrf.mxu0
    %v222 = vpop.f32.mrf.mxu0
    %v223 = vadd.f32 0.0, %v222
    %v224 = vpop.f32.mrf.mxu0
    %225 = vmatprep.mubr.bf16.mxu0 0
    %226 = vmatmul.mubr.bf16.gmra.mxu0 %v124
    %v227 = vpop.f32.mrf.mxu0
    %v228 = vadd.f32 0.0, %v227
    %v229 = vpop.f32.mrf.mxu0
    %v230 = vpop.f32.mrf.mxu0
    %v231 = vadd.f32 0.0, %v230
    %v232 = vpop.f32.mrf.mxu0
    %233 = vmatprep.mubr.bf16.mxu0 0
    %234 = vmatmul.mubr.bf16.gmra.mxu0 %v127
    %v235 = vpop.f32.mrf.mxu0
    %v236 = vadd.f32 0.0, %v235
    %v237 = vpop.f32.mrf.mxu0
    %v238 = vpop.f32.mrf.mxu0
    %v239 = vadd.f32 0.0, %v238
    %v240 = vpop.f32.mrf.mxu0
    %241 = vmatprep.mubr.bf16.mxu0 0
    %242 = vmatmul.mubr.bf16.gmra.mxu0 %v130
    %v243 = vpop.f32.mrf.mxu0
    %v244 = vadd.f32 0.0, %v243
    %v245 = vpop.f32.mrf.mxu0
    %v246 = vpop.f32.mrf.mxu0
    %v247 = vadd.f32 0.0, %v246
    %v248 = vpop.f32.mrf.mxu0
    %249 = vmatprep.mubr.bf16.mxu0 0
    %250 = vmatmul.mubr.bf16.gmra.mxu0 %v133
    %v251 = vpop.f32.mrf.mxu0
    %v252 = vadd.f32 0.0, %v251
    %v253 = vpop.f32.mrf.mxu0
    %v254 = vpop.f32.mrf.mxu0
    %v255 = vadd.f32 0.0, %v254
    %v256 = vpop.f32.mrf.mxu0
    %257 = vmatprep.mubr.bf16.mxu0 0
    %258 = vmatmul.mubr.bf16.gmra.mxu0 %v136
    %v259 = vpop.f32.mrf.mxu0
    %v260 = vadd.f32 0.0, %v259
    %v261 = vpop.f32.mrf.mxu0
    %v262 = vpop.f32.mrf.mxu0
    %v263 = vpop.f32.mrf.mxu0
    %264 = vdwg.mxu0
    %v266 = vlaneseq
    %v267 = vshrl.u32 %v266, 7
    %v268 = vsub.s32 0, %v267
    %v269 = vrot.slane %v28, %v268
    %v271 = vadd.f32 %v269, %v180
    %v272 = vadd.f32 %v269, %v183
    %v273 = vadd.f32 %v269, %v188
    %v274 = vadd.f32 %v269, %v191
    %v275 = vadd.f32 %v269, %v196
    %v276 = vadd.f32 %v269, %v199
    %v277 = vadd.f32 %v269, %v204
    %v278 = vadd.f32 %v269, %v207
    %v279 = vadd.f32 %v269, %v212
    %v280 = vadd.f32 %v269, %v215
    %v281 = vadd.f32 %v269, %v220
    %v282 = vadd.f32 %v269, %v223
    %v283 = vadd.f32 %v269, %v228
    %v284 = vadd.f32 %v269, %v231
    %v285 = vadd.f32 %v269, %v236
    %v286 = vadd.f32 %v269, %v239
    %v287 = vadd.f32 %v269, %v244
    %v288 = vadd.f32 %v269, %v247
    %v289 = vadd.f32 %v269, %v252
    %v290 = vadd.f32 %v269, %v255
    %v291 = vadd.f32 %v269, %v260
    %v292 = vsub.f32 0.0, %v271
    %v293 = vsub.f32 0.0, %v272
    %v294 = vsub.f32 0.0, %v273
    %v295 = vsub.f32 0.0, %v274
    %v296 = vsub.f32 0.0, %v275
    %v297 = vsub.f32 0.0, %v276
    %v298 = vsub.f32 0.0, %v277
    %v299 = vsub.f32 0.0, %v278
    %v300 = vsub.f32 0.0, %v279
    %v301 = vsub.f32 0.0, %v280
    %v302 = vsub.f32 0.0, %v281
    %v303 = vsub.f32 0.0, %v282
    %v304 = vsub.f32 0.0, %v283
    %v305 = vsub.f32 0.0, %v284
    %v306 = vsub.f32 0.0, %v285
    %v307 = vsub.f32 0.0, %v286
    %v308 = vsub.f32 0.0, %v287
    %v309 = vsub.f32 0.0, %v288
    %v310 = vsub.f32 0.0, %v289
    %v311 = vsub.f32 0.0, %v290
    %v312 = vsub.f32 0.0, %v291
    %v313 = vmul.f32 %v292, 1.442695
    %v314 = vpow.pop %v313
    %v315 = vmul.f32 %v293, 1.442695
    %v316 = vpow.pop %v315
    %v317 = vmul.f32 %v294, 1.442695
    %v318 = vpow.pop %v317
    %v319 = vmul.f32 %v295, 1.442695
    %v320 = vpow.pop %v319
    %v321 = vmul.f32 %v296, 1.442695
    %v322 = vpow.pop %v321
    %v323 = vmul.f32 %v297, 1.442695
    %v324 = vpow.pop %v323
    %v325 = vmul.f32 %v298, 1.442695
    %v326 = vpow.pop %v325
    %v327 = vmul.f32 %v299, 1.442695
    %v328 = vpow.pop %v327
    %v329 = vmul.f32 %v300, 1.442695
    %v330 = vpow.pop %v329
    %v331 = vmul.f32 %v301, 1.442695
    %v332 = vpow.pop %v331
    %v333 = vmul.f32 %v302, 1.442695
    %v334 = vpow.pop %v333
    %v335 = vmul.f32 %v303, 1.442695
    %v336 = vpow.pop %v335
    %v337 = vmul.f32 %v304, 1.442695
    %v338 = vpow.pop %v337
    %v339 = vmul.f32 %v305, 1.442695
    %v340 = vpow.pop %v339
    %v341 = vmul.f32 %v306, 1.442695
    %v342 = vpow.pop %v341
    %v343 = vmul.f32 %v307, 1.442695
    %v344 = vpow.pop %v343
    %v345 = vmul.f32 %v308, 1.442695
    %v346 = vpow.pop %v345
    %v347 = vmul.f32 %v309, 1.442695
    %v348 = vpow.pop %v347
    %v349 = vmul.f32 %v310, 1.442695
    %v350 = vpow.pop %v349
    %v351 = vmul.f32 %v311, 1.442695
    %v352 = vpow.pop %v351
    %v353 = vmul.f32 %v312, 1.442695
    %v354 = vpow.pop %v353
    %v355 = vadd.f32 %v314, 1.0
    %v356 = vadd.f32 %v316, 1.0
    %v357 = vadd.f32 %v318, 1.0
    %v358 = vadd.f32 %v320, 1.0
    %v359 = vadd.f32 %v322, 1.0
    %v360 = vadd.f32 %v324, 1.0
    %v361 = vadd.f32 %v326, 1.0
    %v362 = vadd.f32 %v328, 1.0
    %v363 = vadd.f32 %v330, 1.0
    %v364 = vadd.f32 %v332, 1.0
    %v365 = vadd.f32 %v334, 1.0
    %v366 = vadd.f32 %v336, 1.0
    %v367 = vadd.f32 %v338, 1.0
    %v368 = vadd.f32 %v340, 1.0
    %v369 = vadd.f32 %v342, 1.0
    %v370 = vadd.f32 %v344, 1.0
    %v371 = vadd.f32 %v346, 1.0
    %v372 = vadd.f32 %v348, 1.0
    %v373 = vadd.f32 %v350, 1.0
    %v374 = vadd.f32 %v352, 1.0
    %v375 = vadd.f32 %v354, 1.0
    %v376 = vrcp.pop %v355
    %v377 = vrcp.pop %v356
    %v378 = vrcp.pop %v357
    %v379 = vrcp.pop %v358
    %v380 = vrcp.pop %v359
    %v381 = vrcp.pop %v360
    %v382 = vrcp.pop %v361
    %v383 = vrcp.pop %v362
    %v384 = vrcp.pop %v363
    %v385 = vrcp.pop %v364
    %v386 = vrcp.pop %v365
    %v387 = vrcp.pop %v366
    %v388 = vrcp.pop %v367
    %v389 = vrcp.pop %v368
    %v390 = vrcp.pop %v369
    %v391 = vrcp.pop %v370
    %v392 = vrcp.pop %v371
    %v393 = vrcp.pop %v372
    %v394 = vrcp.pop %v373
    %v395 = vrcp.pop %v374
    %v396 = vrcp.pop %v375
    %v397 = vmul.f32 %v271, %v376
    %v398 = vmul.f32 %v272, %v377
    %v399 = vmul.f32 %v273, %v378
    %v400 = vmul.f32 %v274, %v379
    %v401 = vmul.f32 %v275, %v380
    %v402 = vmul.f32 %v276, %v381
    %v403 = vmul.f32 %v277, %v382
    %v404 = vmul.f32 %v278, %v383
    %v405 = vmul.f32 %v279, %v384
    %v406 = vmul.f32 %v280, %v385
    %v407 = vmul.f32 %v281, %v386
    %v408 = vmul.f32 %v282, %v387
    %v409 = vmul.f32 %v283, %v388
    %v410 = vmul.f32 %v284, %v389
    %v411 = vmul.f32 %v285, %v390
    %v412 = vmul.f32 %v286, %v391
    %v413 = vmul.f32 %v287, %v392
    %v414 = vmul.f32 %v288, %v393
    %v415 = vmul.f32 %v289, %v394
    %v416 = vmul.f32 %v290, %v395
    %v417 = vmul.f32 %v291, %v396
    %v418 = vpack.c.bf16 %v398, %v397
    %v419 = vpack.c.bf16 %v400, %v399
    %v420 = vpack.c.bf16 %v402, %v401
    %v421 = vpack.c.bf16 %v404, %v403
    %v422 = vpack.c.bf16 %v406, %v405
    %v423 = vpack.c.bf16 %v408, %v407
    %v424 = vpack.c.bf16 %v410, %v409
    %v425 = vpack.c.bf16 %v412, %v411
    %v426 = vpack.c.bf16 %v414, %v413
    %v427 = vpack.c.bf16 %v416, %v415
    %v428 = vpack.c.bf16 %v417, %v417
    %v429 = vld [vmem:[%s3] sm:$0xf]
    %v430 = vld [vmem:[%s3 + $0x4] sm:$0xf]
    %v431 = vld [vmem:[%s3 + $0x8] sm:$0xf]
    %v432 = vld [vmem:[%s3 + $0xc] sm:$0xf]
    %v433 = vld [vmem:[%s3 + $0x10] sm:$0xf]
    %v434 = vld [vmem:[%s3 + $0x14] sm:$0xf]
    %v435 = vld [vmem:[%s3 + $0x18] sm:$0xf]
    %v436 = vld [vmem:[%s3 + $0x1c] sm:$0xf]
    %v437 = vld [vmem:[%s3 + $0x20] sm:$0xf]
    %v438 = vld [vmem:[%s3 + $0x24] sm:$0xf]
    %v439 = vld [vmem:[%s3 + $0x28] sm:$0xf]
    %v440 = vld [vmem:[%s3 + $0x2c] sm:$0xf]
    %v441 = vld [vmem:[%s3 + $0x30] sm:$0xf]
    %v442 = vld [vmem:[%s3 + $0x34] sm:$0xf]
    %v443 = vld [vmem:[%s3 + $0x38] sm:$0xf]
    %v444 = vld [vmem:[%s3 + $0x3c] sm:$0xf]
    %v445 = vld [vmem:[%s4] sm:$0x1]
    %v447 = vlaneseq
    %v448 = vshrl.u32 %v447, 7
    %v449 = vsub.s32 0, %v448
    %v450 = vrot.slane %v445, %v449
    %v468 = vunpack.c.l.b16 %v429
    %v469 = vunpack.c.l.b16 %v430
    %v470 = vunpack.c.l.b16 %v431
    %v471 = vunpack.c.l.b16 %v432
    %v472 = vunpack.c.l.b16 %v433
    %v473 = vunpack.c.l.b16 %v434
    %v474 = vunpack.c.l.b16 %v435
    %v475 = vunpack.c.l.b16 %v436
    %v476 = vunpack.c.l.b16 %v437
    %v477 = vunpack.c.l.b16 %v438
    %v478 = vunpack.c.l.b16 %v439
    %v479 = vunpack.c.l.b16 %v440
    %v480 = vunpack.c.l.b16 %v441
    %v481 = vunpack.c.l.b16 %v442
    %v482 = vunpack.c.l.b16 %v443
    %v483 = vunpack.c.l.b16 %v444
    %v484 = vpack.c.b16 %v469, %v468
    %v485 = vpack.c.b16 %v471, %v470
    %v486 = vpack.c.b16 %v473, %v472
    %v487 = vpack.c.b16 %v475, %v474
    %v488 = vpack.c.b16 %v477, %v476
    %v489 = vpack.c.b16 %v479, %v478
    %v490 = vpack.c.b16 %v481, %v480
    %v491 = vpack.c.b16 %v483, %v482
    %500 = vmatprep.subr.bf16.mxu0 0
    %501 = vmatpush1.bf16.msra.mxu0 %v491
    %502 = vmatprep.subr.bf16.mxu0 0
    %503 = vmatpush1.bf16.msra.mxu0 %v490
    %504 = vmatprep.subr.bf16.mxu0 0
    %505 = vmatpush1.bf16.msra.mxu0 %v489
    %506 = vmatprep.subr.bf16.mxu0 0
    %507 = vmatpush1.bf16.msra.mxu0 %v488
    %508 = vmatprep.subr.bf16.mxu0 0
    %509 = vmatpush1.bf16.msra.mxu0 %v487
    %510 = vmatprep.subr.bf16.mxu0 0
    %511 = vmatpush1.bf16.msra.mxu0 %v486
    %512 = vmatprep.subr.bf16.mxu0 0
    %513 = vmatpush1.bf16.msra.mxu0 %v485
    %514 = vmatprep.subr.bf16.mxu0 0
    %515 = vmatpush1.bf16.msra.mxu0 %v484
    %516 = vmatprep.subr.bf16.mxu0 0
    %517 = vmatpush2.bf16.msra.mxu0 0
    %518 = vmatprep.subr.bf16.mxu0 0
    %519 = vmatpush2.bf16.msra.mxu0 0
    %520 = vmatprep.subr.bf16.mxu0 0
    %521 = vmatpush2.bf16.msra.mxu0 0
    %522 = vmatprep.subr.bf16.mxu0 0
    %523 = vmatpush2.bf16.msra.mxu0 0
    %524 = vmatprep.subr.bf16.mxu0 0
    %525 = vmatpush2.bf16.msra.mxu0 0
    %526 = vmatprep.subr.bf16.mxu0 0
    %527 = vmatpush2.bf16.msra.mxu0 0
    %528 = vmatprep.subr.bf16.mxu0 0
    %529 = vmatpush2.bf16.msra.mxu0 0
    %530 = vmatprep.subr.bf16.mxu0 0
    %531 = vmatpush2.bf16.msra.mxu0 0
    %532 = vmatprep.mubr.bf16.mxu0 0
    %533 = vmatmul.mubr.bf16.gmra.mxu0 %v418
    %v534 = vpop.f32.mrf.mxu0
    %v535 = vadd.f32 %v450, %v534
    %v536 = vpop.f32.mrf.mxu0
    %v537 = vpop.f32.mrf.mxu0
    %v538 = vadd.f32 %v450, %v537
    %v539 = vpop.f32.mrf.mxu0
    %540 = vmatprep.mubr.bf16.mxu0 0
    %541 = vmatmul.mubr.bf16.gmra.mxu0 %v419
    %v542 = vpop.f32.mrf.mxu0
    %v543 = vadd.f32 %v450, %v542
    %v544 = vpop.f32.mrf.mxu0
    %v545 = vpop.f32.mrf.mxu0
    %v546 = vadd.f32 %v450, %v545
    %v547 = vpop.f32.mrf.mxu0
    %548 = vmatprep.mubr.bf16.mxu0 0
    %549 = vmatmul.mubr.bf16.gmra.mxu0 %v420
    %v550 = vpop.f32.mrf.mxu0
    %v551 = vadd.f32 %v450, %v550
    %v552 = vpop.f32.mrf.mxu0
    %v553 = vpop.f32.mrf.mxu0
    %v554 = vadd.f32 %v450, %v553
    %v555 = vpop.f32.mrf.mxu0
    %556 = vmatprep.mubr.bf16.mxu0 0
    %557 = vmatmul.mubr.bf16.gmra.mxu0 %v421
    %v558 = vpop.f32.mrf.mxu0
    %v559 = vadd.f32 %v450, %v558
    %v560 = vpop.f32.mrf.mxu0
    %v561 = vpop.f32.mrf.mxu0
    %v562 = vadd.f32 %v450, %v561
    %v563 = vpop.f32.mrf.mxu0
    %564 = vmatprep.mubr.bf16.mxu0 0
    %565 = vmatmul.mubr.bf16.gmra.mxu0 %v422
    %v566 = vpop.f32.mrf.mxu0
    %v567 = vadd.f32 %v450, %v566
    %v568 = vpop.f32.mrf.mxu0
    %v569 = vpop.f32.mrf.mxu0
    %v570 = vadd.f32 %v450, %v569
    %v571 = vpop.f32.mrf.mxu0
    %572 = vmatprep.mubr.bf16.mxu0 0
    %573 = vmatmul.mubr.bf16.gmra.mxu0 %v423
    %v574 = vpop.f32.mrf.mxu0
    %v575 = vadd.f32 %v450, %v574
    %v576 = vpop.f32.mrf.mxu0
    %v577 = vpop.f32.mrf.mxu0
    %v578 = vadd.f32 %v450, %v577
    %v579 = vpop.f32.mrf.mxu0
    %580 = vmatprep.mubr.bf16.mxu0 0
    %581 = vmatmul.mubr.bf16.gmra.mxu0 %v424
    %v582 = vpop.f32.mrf.mxu0
    %v583 = vadd.f32 %v450, %v582
    %v584 = vpop.f32.mrf.mxu0
    %v585 = vpop.f32.mrf.mxu0
    %v586 = vadd.f32 %v450, %v585
    %v587 = vpop.f32.mrf.mxu0
    %588 = vmatprep.mubr.bf16.mxu0 0
    %589 = vmatmul.mubr.bf16.gmra.mxu0 %v425
    %v590 = vpop.f32.mrf.mxu0
    %v591 = vadd.f32 %v450, %v590
    %v592 = vpop.f32.mrf.mxu0
    %v593 = vpop.f32.mrf.mxu0
    %v594 = vadd.f32 %v450, %v593
    %v595 = vpop.f32.mrf.mxu0
    %596 = vmatprep.mubr.bf16.mxu0 0
    %597 = vmatmul.mubr.bf16.gmra.mxu0 %v426
    %v598 = vpop.f32.mrf.mxu0
    %v599 = vadd.f32 %v450, %v598
    %v600 = vpop.f32.mrf.mxu0
    %v601 = vpop.f32.mrf.mxu0
    %v602 = vadd.f32 %v450, %v601
    %v603 = vpop.f32.mrf.mxu0
    %604 = vmatprep.mubr.bf16.mxu0 0
    %605 = vmatmul.mubr.bf16.gmra.mxu0 %v427
    %v606 = vpop.f32.mrf.mxu0
    %v607 = vadd.f32 %v450, %v606
    %v608 = vpop.f32.mrf.mxu0
    %v609 = vpop.f32.mrf.mxu0
    %v610 = vadd.f32 %v450, %v609
    %v611 = vpop.f32.mrf.mxu0
    %612 = vmatprep.mubr.bf16.mxu0 0
    %613 = vmatmul.mubr.bf16.gmra.mxu0 %v428
    %v614 = vpop.f32.mrf.mxu0
    %v615 = vadd.f32 %v450, %v614
    %v616 = vpop.f32.mrf.mxu0
    %v617 = vpop.f32.mrf.mxu0
    %v618 = vpop.f32.mrf.mxu0
    %619 = vdwg.mxu0
    %620 = vadd.xlane.f32.xlu0 %v535
    %v621 = vpop.xlane.xlu0 %620
    %622 = vadd.xlane.f32.xlu0 %v538
    %v623 = vpop.xlane.xlu0 %622
    %624 = vadd.xlane.f32.xlu0 %v543
    %v625 = vpop.xlane.xlu0 %624
    %626 = vadd.xlane.f32.xlu0 %v546
    %v627 = vpop.xlane.xlu0 %626
    %628 = vadd.xlane.f32.xlu0 %v551
    %v629 = vpop.xlane.xlu0 %628
    %630 = vadd.xlane.f32.xlu0 %v554
    %v631 = vpop.xlane.xlu0 %630
    %632 = vadd.xlane.f32.xlu0 %v559
    %v633 = vpop.xlane.xlu0 %632
    %634 = vadd.xlane.f32.xlu0 %v562
    %v635 = vpop.xlane.xlu0 %634
    %636 = vadd.xlane.f32.xlu0 %v567
    %v637 = vpop.xlane.xlu0 %636
    %638 = vadd.xlane.f32.xlu0 %v570
    %v639 = vpop.xlane.xlu0 %638
    %640 = vadd.xlane.f32.xlu0 %v575
    %v641 = vpop.xlane.xlu0 %640
    %642 = vadd.xlane.f32.xlu0 %v578
    %v643 = vpop.xlane.xlu0 %642
    %644 = vadd.xlane.f32.xlu0 %v583
    %v645 = vpop.xlane.xlu0 %644
    %646 = vadd.xlane.f32.xlu0 %v586
    %v647 = vpop.xlane.xlu0 %646
    %648 = vadd.xlane.f32.xlu0 %v591
    %v649 = vpop.xlane.xlu0 %648
    %650 = vadd.xlane.f32.xlu0 %v594
    %v651 = vpop.xlane.xlu0 %650
    %652 = vadd.xlane.f32.xlu0 %v599
    %v653 = vpop.xlane.xlu0 %652
    %654 = vadd.xlane.f32.xlu0 %v602
    %v655 = vpop.xlane.xlu0 %654
    %656 = vadd.xlane.f32.xlu0 %v607
    %v657 = vpop.xlane.xlu0 %656
    %658 = vadd.xlane.f32.xlu0 %v610
    %v659 = vpop.xlane.xlu0 %658
    %660 = vadd.xlane.f32.xlu0 %v615
    %v661 = vpop.xlane.xlu0 %660
    %v662 = vrcp.pop 128.0
    %v663 = vmul.f32 %v621, %v662
    %v664 = vmul.f32 %v623, %v662
    %v665 = vmul.f32 %v625, %v662
    %v666 = vmul.f32 %v627, %v662
    %v667 = vmul.f32 %v629, %v662
    %v668 = vmul.f32 %v631, %v662
    %v669 = vmul.f32 %v633, %v662
    %v670 = vmul.f32 %v635, %v662
    %v671 = vmul.f32 %v637, %v662
    %v672 = vmul.f32 %v639, %v662
    %v673 = vmul.f32 %v641, %v662
    %v674 = vmul.f32 %v643, %v662
    %v675 = vmul.f32 %v645, %v662
    %v676 = vmul.f32 %v647, %v662
    %v677 = vmul.f32 %v649, %v662
    %v678 = vmul.f32 %v651, %v662
    %v679 = vmul.f32 %v653, %v662
    %v680 = vmul.f32 %v655, %v662
    %v681 = vmul.f32 %v657, %v662
    %v682 = vmul.f32 %v659, %v662
    %v683 = vmul.f32 %v661, %v662
    %v684 = vsub.f32 %v535, %v663
    %v685 = vsub.f32 %v538, %v664
    %v686 = vsub.f32 %v543, %v665
    %v687 = vsub.f32 %v546, %v666
    %v688 = vsub.f32 %v551, %v667
    %v689 = vsub.f32 %v554, %v668
    %v690 = vsub.f32 %v559, %v669
    %v691 = vsub.f32 %v562, %v670
    %v692 = vsub.f32 %v567, %v671
    %v693 = vsub.f32 %v570, %v672
    %v694 = vsub.f32 %v575, %v673
    %v695 = vsub.f32 %v578, %v674
    %v696 = vsub.f32 %v583, %v675
    %v697 = vsub.f32 %v586, %v676
    %v698 = vsub.f32 %v591, %v677
    %v699 = vsub.f32 %v594, %v678
    %v700 = vsub.f32 %v599, %v679
    %v701 = vsub.f32 %v602, %v680
    %v702 = vsub.f32 %v607, %v681
    %v703 = vsub.f32 %v610, %v682
    %v704 = vsub.f32 %v615, %v683
    %v705 = vmul.f32 %v684, %v684
    %v706 = vmul.f32 %v685, %v685
    %v707 = vmul.f32 %v686, %v686
    %v708 = vmul.f32 %v687, %v687
    %v709 = vmul.f32 %v688, %v688
    %v710 = vmul.f32 %v689, %v689
    %v711 = vmul.f32 %v690, %v690
    %v712 = vmul.f32 %v691, %v691
    %v713 = vmul.f32 %v692, %v692
    %v714 = vmul.f32 %v693, %v693
    %v715 = vmul.f32 %v694, %v694
    %v716 = vmul.f32 %v695, %v695
    %v717 = vmul.f32 %v696, %v696
    %v718 = vmul.f32 %v697, %v697
    %v719 = vmul.f32 %v698, %v698
    %v720 = vmul.f32 %v699, %v699
    %v721 = vmul.f32 %v700, %v700
    %v722 = vmul.f32 %v701, %v701
    %v723 = vmul.f32 %v702, %v702
    %v724 = vmul.f32 %v703, %v703
    %v725 = vmul.f32 %v704, %v704
    %726 = vadd.xlane.f32.xlu0 %v705
    %v727 = vpop.xlane.xlu0 %726
    %728 = vadd.xlane.f32.xlu0 %v706
    %v729 = vpop.xlane.xlu0 %728
    %730 = vadd.xlane.f32.xlu0 %v707
    %v731 = vpop.xlane.xlu0 %730
    %732 = vadd.xlane.f32.xlu0 %v708
    %v733 = vpop.xlane.xlu0 %732
    %734 = vadd.xlane.f32.xlu0 %v709
    %v735 = vpop.xlane.xlu0 %734
    %736 = vadd.xlane.f32.xlu0 %v710
    %v737 = vpop.xlane.xlu0 %736
    %738 = vadd.xlane.f32.xlu0 %v711
    %v739 = vpop.xlane.xlu0 %738
    %740 = vadd.xlane.f32.xlu0 %v712
    %v741 = vpop.xlane.xlu0 %740
    %742 = vadd.xlane.f32.xlu0 %v713
    %v743 = vpop.xlane.xlu0 %742
    %744 = vadd.xlane.f32.xlu0 %v714
    %v745 = vpop.xlane.xlu0 %744
    %746 = vadd.xlane.f32.xlu0 %v715
    %v747 = vpop.xlane.xlu0 %746
    %748 = vadd.xlane.f32.xlu0 %v716
    %v749 = vpop.xlane.xlu0 %748
    %750 = vadd.xlane.f32.xlu0 %v717
    %v751 = vpop.xlane.xlu0 %750
    %752 = vadd.xlane.f32.xlu0 %v718
    %v753 = vpop.xlane.xlu0 %752
    %754 = vadd.xlane.f32.xlu0 %v719
    %v755 = vpop.xlane.xlu0 %754
    %756 = vadd.xlane.f32.xlu0 %v720
    %v757 = vpop.xlane.xlu0 %756
    %758 = vadd.xlane.f32.xlu0 %v721
    %v759 = vpop.xlane.xlu0 %758
    %760 = vadd.xlane.f32.xlu0 %v722
    %v761 = vpop.xlane.xlu0 %760
    %762 = vadd.xlane.f32.xlu0 %v723
    %v763 = vpop.xlane.xlu0 %762
    %764 = vadd.xlane.f32.xlu0 %v724
    %v765 = vpop.xlane.xlu0 %764
    %766 = vadd.xlane.f32.xlu0 %v725
    %v767 = vpop.xlane.xlu0 %766
    %v768 = vmul.f32 %v727, %v662
    %v769 = vmul.f32 %v729, %v662
    %v770 = vmul.f32 %v731, %v662
    %v771 = vmul.f32 %v733, %v662
    %v772 = vmul.f32 %v735, %v662
    %v773 = vmul.f32 %v737, %v662
    %v774 = vmul.f32 %v739, %v662
    %v775 = vmul.f32 %v741, %v662
    %v776 = vmul.f32 %v743, %v662
    %v777 = vmul.f32 %v745, %v662
    %v778 = vmul.f32 %v747, %v662
    %v779 = vmul.f32 %v749, %v662
    %v780 = vmul.f32 %v751, %v662
    %v781 = vmul.f32 %v753, %v662
    %v782 = vmul.f32 %v755, %v662
    %v783 = vmul.f32 %v757, %v662
    %v784 = vmul.f32 %v759, %v662
    %v785 = vmul.f32 %v761, %v662
    %v786 = vmul.f32 %v763, %v662
    %v787 = vmul.f32 %v765, %v662
    %v788 = vmul.f32 %v767, %v662
    %v789 = vadd.f32 %v768, 1e-05
    %v790 = vadd.f32 %v769, 1e-05
    %v791 = vadd.f32 %v770, 1e-05
    %v792 = vadd.f32 %v771, 1e-05
    %v793 = vadd.f32 %v772, 1e-05
    %v794 = vadd.f32 %v773, 1e-05
    %v795 = vadd.f32 %v774, 1e-05
    %v796 = vadd.f32 %v775, 1e-05
    %v797 = vadd.f32 %v776, 1e-05
    %v798 = vadd.f32 %v777, 1e-05
    %v799 = vadd.f32 %v778, 1e-05
    %v800 = vadd.f32 %v779, 1e-05
    %v801 = vadd.f32 %v780, 1e-05
    %v802 = vadd.f32 %v781, 1e-05
    %v803 = vadd.f32 %v782, 1e-05
    %v804 = vadd.f32 %v783, 1e-05
    %v805 = vadd.f32 %v784, 1e-05
    %v806 = vadd.f32 %v785, 1e-05
    %v807 = vadd.f32 %v786, 1e-05
    %v808 = vadd.f32 %v787, 1e-05
    %v809 = vadd.f32 %v788, 1e-05
    %v810 = vrsqrt.pop %v789
    %v811 = vrsqrt.pop %v790
    %v812 = vrsqrt.pop %v791
    %v813 = vrsqrt.pop %v792
    %v814 = vrsqrt.pop %v793
    %v815 = vrsqrt.pop %v794
    %v816 = vrsqrt.pop %v795
    %v817 = vrsqrt.pop %v796
    %v818 = vrsqrt.pop %v797
    %v819 = vrsqrt.pop %v798
    %v820 = vrsqrt.pop %v799
    %v821 = vrsqrt.pop %v800
    %v822 = vrsqrt.pop %v801
    %v823 = vrsqrt.pop %v802
    %v824 = vrsqrt.pop %v803
    %v825 = vrsqrt.pop %v804
    %v826 = vrsqrt.pop %v805
    %v827 = vrsqrt.pop %v806
    %v828 = vrsqrt.pop %v807
    %v829 = vrsqrt.pop %v808
    %v830 = vrsqrt.pop %v809
    %v831 = vmul.f32 %v684, %v810
    %v832 = vmul.f32 %v685, %v811
    %v833 = vmul.f32 %v686, %v812
    %v834 = vmul.f32 %v687, %v813
    %v835 = vmul.f32 %v688, %v814
    %v836 = vmul.f32 %v689, %v815
    %v837 = vmul.f32 %v690, %v816
    %v838 = vmul.f32 %v691, %v817
    %v839 = vmul.f32 %v692, %v818
    %v840 = vmul.f32 %v693, %v819
    %v841 = vmul.f32 %v694, %v820
    %v842 = vmul.f32 %v695, %v821
    %v843 = vmul.f32 %v696, %v822
    %v844 = vmul.f32 %v697, %v823
    %v845 = vmul.f32 %v698, %v824
    %v846 = vmul.f32 %v699, %v825
    %v847 = vmul.f32 %v700, %v826
    %v848 = vmul.f32 %v701, %v827
    %v849 = vmul.f32 %v702, %v828
    %v850 = vmul.f32 %v703, %v829
    %v851 = vmul.f32 %v704, %v830
    %v852 = vld [vmem:[%s5] sm:$0x1]
    %v854 = vlaneseq
    %v855 = vshrl.u32 %v854, 7
    %v856 = vsub.s32 0, %v855
    %v857 = vrot.slane %v852, %v856
    %v859 = vmul.f32 %v831, %v857
    %v860 = vmul.f32 %v832, %v857
    %v861 = vmul.f32 %v833, %v857
    %v862 = vmul.f32 %v834, %v857
    %v863 = vmul.f32 %v835, %v857
    %v864 = vmul.f32 %v836, %v857
    %v865 = vmul.f32 %v837, %v857
    %v866 = vmul.f32 %v838, %v857
    %v867 = vmul.f32 %v839, %v857
    %v868 = vmul.f32 %v840, %v857
    %v869 = vmul.f32 %v841, %v857
    %v870 = vmul.f32 %v842, %v857
    %v871 = vmul.f32 %v843, %v857
    %v872 = vmul.f32 %v844, %v857
    %v873 = vmul.f32 %v845, %v857
    %v874 = vmul.f32 %v846, %v857
    %v875 = vmul.f32 %v847, %v857
    %v876 = vmul.f32 %v848, %v857
    %v877 = vmul.f32 %v849, %v857
    %v878 = vmul.f32 %v850, %v857
    %v879 = vmul.f32 %v851, %v857
    %v880 = vld [vmem:[%s6] sm:$0x1]
    %v882 = vlaneseq
    %v883 = vshrl.u32 %v882, 7
    %v884 = vsub.s32 0, %v883
    %v885 = vrot.slane %v880, %v884
    %v887 = vadd.f32 %v859, %v885
    %v888 = vadd.f32 %v860, %v885
    %v889 = vadd.f32 %v861, %v885
    %v890 = vadd.f32 %v862, %v885
    %v891 = vadd.f32 %v863, %v885
    %v892 = vadd.f32 %v864, %v885
    %v893 = vadd.f32 %v865, %v885
    %v894 = vadd.f32 %v866, %v885
    %v895 = vadd.f32 %v867, %v885
    %v896 = vadd.f32 %v868, %v885
    %v897 = vadd.f32 %v869, %v885
    %v898 = vadd.f32 %v870, %v885
    %v899 = vadd.f32 %v871, %v885
    %v900 = vadd.f32 %v872, %v885
    %v901 = vadd.f32 %v873, %v885
    %v902 = vadd.f32 %v874, %v885
    %v903 = vadd.f32 %v875, %v885
    %v904 = vadd.f32 %v876, %v885
    %v905 = vadd.f32 %v877, %v885
    %v906 = vadd.f32 %v878, %v885
    %v907 = vadd.f32 %v879, %v885
    %v908 = vpack.c.bf16 %v888, %v887
    %v909 = vpack.c.bf16 %v890, %v889
    %v910 = vpack.c.bf16 %v892, %v891
    %v911 = vpack.c.bf16 %v894, %v893
    %v912 = vpack.c.bf16 %v896, %v895
    %v913 = vpack.c.bf16 %v898, %v897
    %v914 = vpack.c.bf16 %v900, %v899
    %v915 = vpack.c.bf16 %v902, %v901
    %v916 = vpack.c.bf16 %v904, %v903
    %v917 = vpack.c.bf16 %v906, %v905
    %v918 = vpack.c.bf16 %v907, %v907
    %v930 = vunpack.c.l.b16 %v908
    %v931 = vunpack.c.h.b16 %v908
    %v932 = vunpack.c.l.b16 %v909
    %v933 = vunpack.c.h.b16 %v909
    %v934 = vunpack.c.l.b16 %v910
    %v935 = vunpack.c.h.b16 %v910
    %v936 = vunpack.c.l.b16 %v911
    %v937 = vunpack.c.h.b16 %v911
    %v938 = vunpack.c.l.b16 %v912
    %v939 = vunpack.c.h.b16 %v912
    %v940 = vunpack.c.l.b16 %v913
    %v941 = vunpack.c.h.b16 %v913
    %v942 = vunpack.c.l.b16 %v914
    %v943 = vunpack.c.h.b16 %v914
    %v944 = vunpack.c.l.b16 %v915
    %v945 = vunpack.c.h.b16 %v915
    %v946 = vunpack.c.l.b16 %v916
    %v947 = vunpack.c.h.b16 %v916
    %v948 = vunpack.c.l.b16 %v917
    %v949 = vunpack.c.h.b16 %v917
    %v950 = vunpack.c.l.b16 %v918
    %v951 = vpack.c.b16 %v930, %v930
    %v952 = vpack.c.b16 %v931, %v931
    %v953 = vpack.c.b16 %v932, %v932
    %v954 = vpack.c.b16 %v933, %v933
    %v955 = vpack.c.b16 %v934, %v934
    %v956 = vpack.c.b16 %v935, %v935
    %v957 = vpack.c.b16 %v936, %v936
    %v958 = vpack.c.b16 %v937, %v937
    %v959 = vpack.c.b16 %v938, %v938
    %v960 = vpack.c.b16 %v939, %v939
    %v961 = vpack.c.b16 %v940, %v940
    %v962 = vpack.c.b16 %v941, %v941
    %v963 = vpack.c.b16 %v942, %v942
    %v964 = vpack.c.b16 %v943, %v943
    %v965 = vpack.c.b16 %v944, %v944
    %v966 = vpack.c.b16 %v945, %v945
    %v967 = vpack.c.b16 %v946, %v946
    %v968 = vpack.c.b16 %v947, %v947
    %v969 = vpack.c.b16 %v948, %v948
    %v970 = vpack.c.b16 %v949, %v949
    %v971 = vpack.c.b16 %v950, %v950
    %993 = vst [vmem:[#allocation2] sm:$0xf] %v951
    %994 = vst [vmem:[#allocation2 + $0x4] sm:$0xf] %v952
    %995 = vst [vmem:[#allocation2 + $0x8] sm:$0xf] %v953
    %996 = vst [vmem:[#allocation2 + $0xc] sm:$0xf] %v954
    %997 = vst [vmem:[#allocation2 + $0x10] sm:$0xf] %v955
    %998 = vst [vmem:[#allocation2 + $0x14] sm:$0xf] %v956
    %999 = vst [vmem:[#allocation2 + $0x18] sm:$0xf] %v957
    %1000 = vst [vmem:[#allocation2 + $0x1c] sm:$0xf] %v958
    %1001 = vst [vmem:[#allocation2 + $0x20] sm:$0xf] %v959
    %1002 = vst [vmem:[#allocation2 + $0x24] sm:$0xf] %v960
    %1003 = vst [vmem:[#allocation2 + $0x28] sm:$0xf] %v961
    %1004 = vst [vmem:[#allocation2 + $0x2c] sm:$0xf] %v962
    %1005 = vst [vmem:[#allocation2 + $0x30] sm:$0xf] %v963
    %1006 = vst [vmem:[#allocation2 + $0x34] sm:$0xf] %v964
    %1007 = vst [vmem:[#allocation2 + $0x38] sm:$0xf] %v965
    %1008 = vst [vmem:[#allocation2 + $0x3c] sm:$0xf] %v966
    %1009 = vst [vmem:[#allocation2 + $0x40] sm:$0xf] %v967
    %1010 = vst [vmem:[#allocation2 + $0x44] sm:$0xf] %v968
    %1011 = vst [vmem:[#allocation2 + $0x48] sm:$0xf] %v969
    %1012 = vst [vmem:[#allocation2 + $0x4c] sm:$0xf] %v970
    %1013 = vst [vmem:[#allocation2 + $0x50] sm:$0xf] %v971
    // Predicated region
    $region30: #{tpu_custom_call.1} parent=1 // pred_check
      _
    $region31: #{tpu_custom_call.1} parent=1 // pred_check_branch
      %1015 = sbr.rel (0) target = $region33
    $region32: #{tpu_custom_call.1} parent=1 // pred_region
      %s1017 = ssub.s32 1344, 1344
      %1018 = vsyncadd [#allocation3], %s1017
      %s1019 = sshll.u32 [#allocation2], 4
      %s1020 = int_to_ptr.vmem [resolvable:$true] %s1019
      %1025 = dma.vmem_to_hbm [thread:$0]  %s1020, 1344, %s7, [#allocation3], 64, 64, 4
    $region33: #{tpu_custom_call.1} parent=1 // pred_fallthru
      _
    // Predicated region
    $region34: #{tpu_custom_call.1} parent=1 // pred_check
      _
    $region35: #{tpu_custom_call.1} parent=1 // pred_check_branch
      %1027 = sbr.rel (0) target = $region37
    $region36: #{tpu_custom_call.1} parent=1 // pred_region
      %1028 = dma.done [#allocation3], 1344
    $region37: #{tpu_custom_call.1} parent=1 // pred_fallthru
      _
    %1029 = vsyncpa [#allocation3], 1

</llo_original>
